<compile_context>
chip_gen: v5e
topology: v5e:2x2
jax: 0.10.0
libtpu: 0.0.40
codegen_flags: <defaults>
</compile_context>

<pallas_src>
import jax
import jax.numpy as jnp
from jax.experimental import pallas as pl
from jax.experimental.pallas import tpu as pltpu

POOL = 63        # MaxPool1d kernel size (== T, exactly one pooling window)
N_CLS = 9        # final Linear output size
HIDDEN_GRU = 5   # module default


def _kernel(x_ref, hid_ref, w1m_ref, w1a_ref, w1h_ref, b1_ref, w2_ref, b2_ref, out_ref):
    # x: (B, T, H).  MaxPool1d(63) over T==63 -> per-(b,h) max over time;
    # AdaptiveAvgPool1d(1) -> per-(b,h) mean over time.
    x = x_ref[...]
    x_max = jnp.max(x, axis=1)                        # (B, H)
    x_avg = jnp.sum(x, axis=1) * (1.0 / x.shape[1])   # (B, H), static T -> constant reciprocal

    # First Linear over the concatenated features [x_max | x_avg | hidden]:
    # concat is folded into column-split weights w1m|w1a|w1h, each (H, 3H).
    h1 = (jnp.dot(x_max, w1m_ref[...], preferred_element_type=jnp.float32)
          + jnp.dot(x_avg, w1a_ref[...], preferred_element_type=jnp.float32)
          + jnp.dot(hid_ref[...], w1h_ref[...], preferred_element_type=jnp.float32)
          + b1_ref[...])

    # TODO(synk): nn.Dropout(p=0.2) is the identity in eval(); training-mode masking not implemented.

    out_ref[...] = jnp.dot(h1, w2_ref[...], preferred_element_type=jnp.float32) + b2_ref[...]


def init_params(key, hidden_gru=HIDDEN_GRU):
    """Deterministic synthetic parameters matching the PyTorch module's shapes."""
    d = 3 * hidden_gru
    ks = jax.random.split(key, 4)
    k1 = 1.0 / jnp.sqrt(jnp.float32(d))
    W1 = jax.random.uniform(ks[0], (d, d), jnp.float32, -k1, k1)      # fc_head[1]
    b1 = jax.random.uniform(ks[1], (d,), jnp.float32, -k1, k1)
    W2 = jax.random.uniform(ks[2], (N_CLS, d), jnp.float32, -k1, k1)  # fc_head[3]
    b2 = jax.random.uniform(ks[3], (N_CLS,), jnp.float32, -k1, k1)
    return dict(W1=W1, b1=b1, W2=W2, b2=b2)


def concat_classifier_forward(x, hidden, params):
    """x: (B, T=63, H=hidden_gru) f32; hidden: (1, B, hidden_gru) f32 -> (B, 9)."""
    B, T, H = x.shape
    assert T == POOL, "MaxPool1d(63) + Flatten + Linear(3*hidden_gru, .) implies T == 63"
    d = 3 * H
    assert params["W1"].shape == (d, d)
    assert hidden.shape == (1, B, H)

    # hidden.view(batch, -1, 1) on a contiguous (1, B, H) tensor: row b == hidden[0, b, :].
    hid = hidden.reshape(B, H)

    W1 = params["W1"]
    w1m = W1[:, 0:H].T            # (H, 3H)  acts on x_max
    w1a = W1[:, H:2 * H].T        # (H, 3H)  acts on x_avg
    w1h = W1[:, 2 * H:3 * H].T    # (H, 3H)  acts on hidden
    b1 = params["b1"].reshape(1, d)
    w2 = params["W2"].T           # (3H, 9)
    b2 = params["b2"].reshape(1, N_CLS)

    vmem = pl.BlockSpec(memory_space=pltpu.MemorySpace.VMEM)
    return pl.pallas_call(
        _kernel,
        out_shape=jax.ShapeDtypeStruct((B, N_CLS), jnp.float32),
        in_specs=[vmem] * 8,
        out_specs=vmem,
    )(x, hid, w1m, w1a, w1h, b1, w2, b2)


def reference_forward(x, hidden, params):
    """Pure-JAX reference reproducing the PyTorch forward exactly (eval mode)."""
    B, T, H = x.shape
    xt = jnp.transpose(x, (0, 2, 1))                 # x.transpose(1, 2): (B, H, T)
    x_max = jnp.max(xt, axis=-1)                     # MaxPool1d(63): one window over T==63
    x_avg = jnp.mean(xt, axis=-1)                    # AdaptiveAvgPool1d(1)
    x_hid = hidden.reshape(B, H)                     # hidden.view(batch, -1, 1)
    feat = jnp.concatenate([x_max, x_avg, x_hid], axis=-1)   # cat along channels, then Flatten
    h1 = feat @ params["W1"].T + params["b1"]        # Dropout == identity at inference
    return h1 @ params["W2"].T + params["b2"]


if __name__ == "__main__":
    key = jax.random.PRNGKey(0)
    kx, kh, kp = jax.random.split(key, 3)

    B, T, H = 2, POOL, HIDDEN_GRU
    x = jax.random.normal(kx, (B, T, H), jnp.float32)
    hidden = jax.random.normal(kh, (1, B, H), jnp.float32)
    params = init_params(kp, H)

    out = jax.block_until_ready(concat_classifier_forward(x, hidden, params))
    ref = jax.block_until_ready(reference_forward(x, hidden, params))

    assert out.shape == (B, N_CLS)
    assert jnp.allclose(out, ref, atol=1e-5, rtol=1e-5), (out, ref)
    print("KERNEL_OK")
</pallas_src>

<mosaic_0001>
module attributes {stable_mosaic.version = 11 : i64} {
  func.func @_kernel(%arg0: memref<2x63x5xf32, #tpu.memory_space<vmem>>, %arg1: memref<2x5xf32, #tpu.memory_space<vmem>>, %arg2: memref<5x15xf32, #tpu.memory_space<vmem>>, %arg3: memref<5x15xf32, #tpu.memory_space<vmem>>, %arg4: memref<5x15xf32, #tpu.memory_space<vmem>>, %arg5: memref<1x15xf32, #tpu.memory_space<vmem>>, %arg6: memref<15x9xf32, #tpu.memory_space<vmem>>, %arg7: memref<1x9xf32, #tpu.memory_space<vmem>>, %arg8: memref<2x9xf32, #tpu.memory_space<vmem>>) attributes {dimension_semantics = [], scalar_prefetch = 0 : i64, scratch_operands = 0 : i64, tpu.core_type = #tpu.core_type<tc>} {
    %c0 = arith.constant 0 : index
    %c0_0 = arith.constant 0 : index
    %c0_1 = arith.constant 0 : index
    %0 = vector.load %arg0[%c0, %c0_0, %c0_1] : memref<2x63x5xf32, #tpu.memory_space<vmem>>, vector<2x63x5xf32>
    %cst = arith.constant dense<0xFF800000> : vector<2x5xf32>
    %1 = vector.multi_reduction <maximumf>, %0, %cst [1] : vector<2x63x5xf32> to vector<2x5xf32>
    %cst_2 = arith.constant dense<0.000000e+00> : vector<2x5xf32>
    %2 = vector.multi_reduction <add>, %0, %cst_2 [1] : vector<2x63x5xf32> to vector<2x5xf32>
    %cst_3 = arith.constant 0.0158730168 : f32
    %3 = vector.broadcast %cst_3 : f32 to vector<2x5xf32>
    %4 = arith.mulf %2, %3 : vector<2x5xf32>
    %c0_4 = arith.constant 0 : index
    %c0_5 = arith.constant 0 : index
    %5 = vector.load %arg2[%c0_4, %c0_5] : memref<5x15xf32, #tpu.memory_space<vmem>>, vector<5x15xf32>
    %cst_6 = arith.constant dense<0.000000e+00> : vector<2x15xf32>
    %6 = tpu.matmul %1, %5, %cst_6 {dimension_numbers = #tpu.dot_dimension_numbers<[1], [0], [0], [1], [0, 0, 1, 1], [], []>} : vector<2x5xf32>, vector<5x15xf32>, vector<2x15xf32> -> vector<2x15xf32>
    %c0_7 = arith.constant 0 : index
    %c0_8 = arith.constant 0 : index
    %7 = vector.load %arg3[%c0_7, %c0_8] : memref<5x15xf32, #tpu.memory_space<vmem>>, vector<5x15xf32>
    %cst_9 = arith.constant dense<0.000000e+00> : vector<2x15xf32>
    %8 = tpu.matmul %4, %7, %cst_9 {dimension_numbers = #tpu.dot_dimension_numbers<[1], [0], [0], [1], [0, 0, 1, 1], [], []>} : vector<2x5xf32>, vector<5x15xf32>, vector<2x15xf32> -> vector<2x15xf32>
    %9 = arith.addf %6, %8 : vector<2x15xf32>
    %c0_10 = arith.constant 0 : index
    %c0_11 = arith.constant 0 : index
    %10 = vector.load %arg1[%c0_10, %c0_11] : memref<2x5xf32, #tpu.memory_space<vmem>>, vector<2x5xf32>
    %c0_12 = arith.constant 0 : index
    %c0_13 = arith.constant 0 : index
    %11 = vector.load %arg4[%c0_12, %c0_13] : memref<5x15xf32, #tpu.memory_space<vmem>>, vector<5x15xf32>
    %cst_14 = arith.constant dense<0.000000e+00> : vector<2x15xf32>
    %12 = tpu.matmul %10, %11, %cst_14 {dimension_numbers = #tpu.dot_dimension_numbers<[1], [0], [0], [1], [0, 0, 1, 1], [], []>} : vector<2x5xf32>, vector<5x15xf32>, vector<2x15xf32> -> vector<2x15xf32>
    %13 = arith.addf %9, %12 : vector<2x15xf32>
    %c0_15 = arith.constant 0 : index
    %c0_16 = arith.constant 0 : index
    %14 = vector.load %arg5[%c0_15, %c0_16] : memref<1x15xf32, #tpu.memory_space<vmem>>, vector<1x15xf32>
    %15 = vector.broadcast %14 : vector<1x15xf32> to vector<2x15xf32>
    %16 = arith.addf %13, %15 : vector<2x15xf32>
    %c0_17 = arith.constant 0 : index
    %c0_18 = arith.constant 0 : index
    %17 = vector.load %arg6[%c0_17, %c0_18] : memref<15x9xf32, #tpu.memory_space<vmem>>, vector<15x9xf32>
    %cst_19 = arith.constant dense<0.000000e+00> : vector<2x9xf32>
    %18 = tpu.matmul %16, %17, %cst_19 {dimension_numbers = #tpu.dot_dimension_numbers<[1], [0], [0], [1], [0, 0, 1, 1], [], []>} : vector<2x15xf32>, vector<15x9xf32>, vector<2x9xf32> -> vector<2x9xf32>
    %c0_20 = arith.constant 0 : index
    %c0_21 = arith.constant 0 : index
    %19 = vector.load %arg7[%c0_20, %c0_21] : memref<1x9xf32, #tpu.memory_space<vmem>>, vector<1x9xf32>
    %20 = vector.broadcast %19 : vector<1x9xf32> to vector<2x9xf32>
    %21 = arith.addf %18, %20 : vector<2x9xf32>
    %c0_22 = arith.constant 0 : index
    %c0_23 = arith.constant 0 : index
    %22 = vector.load %arg8[%c0_22, %c0_23] : memref<2x9xf32, #tpu.memory_space<vmem>>, vector<2x9xf32>
    tpu.vector_store %arg8[%c0_22, %c0_23], %21 {strides = array<i32>} : memref<2x9xf32, #tpu.memory_space<vmem>>, vector<2x9xf32>,
    return
  }
}

</mosaic_0001>

<llo_original>
// kernel: tpu_custom_call.1
$region0: #{tpu_custom_call.1}
  #allocation0 [shape = 'u32[]', space=smem, size = 0x4, offset = 0x4, fixed_abs, tag = 'smem constant byte address 0x4 - core index']
  #allocation1 [shape = 'u32[72,128]{1,0:T(1,128)}', space=vmem, size = 0x9000, scoped, tag = 'internal scratch']
  %s0 = inlined_call_operand.vmem [shape: f32[2,63,5], index: 0, kind: input, shape index: {}]
  %s1 = inlined_call_operand.vmem [shape: f32[2,5], index: 1, kind: input, shape index: {}]
  %s2 = inlined_call_operand.vmem [shape: f32[5,15], index: 2, kind: input, shape index: {}]
  %s3 = inlined_call_operand.vmem [shape: f32[5,15], index: 3, kind: input, shape index: {}]
  %s4 = inlined_call_operand.vmem [shape: f32[5,15], index: 4, kind: input, shape index: {}]
  %s5 = inlined_call_operand.vmem [shape: f32[1,15], index: 5, kind: input, shape index: {}]
  %s6 = inlined_call_operand.vmem [shape: f32[15,9], index: 6, kind: input, shape index: {}]
  %s7 = inlined_call_operand.vmem [shape: f32[1,9], index: 7, kind: input, shape index: {}]
  %s8 = inlined_call_operand.hbm [shape: f32[2,9], index: 8, kind: output, shape index: {}]
  %s9 = sld [smem:[#allocation0]]
  $region42: #{tpu_custom_call.1} parent=0
    _
  %s11 = ssub.s32 1, %s9
  %s12 = scalar_select 0, %s11, %s9
  $region1: #{tpu_custom_call.1} parent=0
    #allocation2 [shape = 'u8[1024]{0}', space=vmem, size = 0x400, scoped, tag = 'output window, operand 0, single buffered']
    #allocation3 [shape = 's32[1]{0}', space=sflag, size = 0x4, scoped, tag = 'scoped memory for tpu_custom_call.1']
    %13 = vsyncpa [#allocation3], 0
    // Predicated region
    $region2: #{tpu_custom_call.1} parent=1 // pred_check
      _
    $region3: #{tpu_custom_call.1} parent=1 // pred_check_branch
      %15 = sbr.rel (0) target = $region5
    $region4: #{tpu_custom_call.1} parent=1 // pred_region
      _
    $region5: #{tpu_custom_call.1} parent=1 // pred_fallthru
      _
    // Predicated region
    $region6: #{tpu_custom_call.1} parent=1 // pred_check
      _
    $region7: #{tpu_custom_call.1} parent=1 // pred_check_branch
      %17 = sbr.rel (0) target = $region9
    $region8: #{tpu_custom_call.1} parent=1 // pred_region
      _
    $region9: #{tpu_custom_call.1} parent=1 // pred_fallthru
      _
    // Predicated region
    $region10: #{tpu_custom_call.1} parent=1 // pred_check
      _
    $region11: #{tpu_custom_call.1} parent=1 // pred_check_branch
      %19 = sbr.rel (0) target = $region13
    $region12: #{tpu_custom_call.1} parent=1 // pred_region
      _
    $region13: #{tpu_custom_call.1} parent=1 // pred_fallthru
      _
    // Predicated region
    $region14: #{tpu_custom_call.1} parent=1 // pred_check
      _
    $region15: #{tpu_custom_call.1} parent=1 // pred_check_branch
      %21 = sbr.rel (0) target = $region17
    $region16: #{tpu_custom_call.1} parent=1 // pred_region
      _
    $region17: #{tpu_custom_call.1} parent=1 // pred_fallthru
      _
    // Predicated region
    $region18: #{tpu_custom_call.1} parent=1 // pred_check
      _
    $region19: #{tpu_custom_call.1} parent=1 // pred_check_branch
      %23 = sbr.rel (0) target = $region21
    $region20: #{tpu_custom_call.1} parent=1 // pred_region
      _
    $region21: #{tpu_custom_call.1} parent=1 // pred_fallthru
      _
    // Predicated region
    $region22: #{tpu_custom_call.1} parent=1 // pred_check
      _
    $region23: #{tpu_custom_call.1} parent=1 // pred_check_branch
      %25 = sbr.rel (0) target = $region25
    $region24: #{tpu_custom_call.1} parent=1 // pred_region
      _
    $region25: #{tpu_custom_call.1} parent=1 // pred_fallthru
      _
    // Predicated region
    $region26: #{tpu_custom_call.1} parent=1 // pred_check
      _
    $region27: #{tpu_custom_call.1} parent=1 // pred_check_branch
      %27 = sbr.rel (0) target = $region29
    $region28: #{tpu_custom_call.1} parent=1 // pred_region
      _
    $region29: #{tpu_custom_call.1} parent=1 // pred_fallthru
      _
    // Predicated region
    $region30: #{tpu_custom_call.1} parent=1 // pred_check
      _
    $region31: #{tpu_custom_call.1} parent=1 // pred_check_branch
      %29 = sbr.rel (0) target = $region33
    $region32: #{tpu_custom_call.1} parent=1 // pred_region
      _
    $region33: #{tpu_custom_call.1} parent=1 // pred_fallthru
      _
    %v30 = vld [vmem:[%s0] sm:$0xff]
    %v31 = vld [vmem:[%s0 + $0x8] sm:$0xff]
    %v32 = vld [vmem:[%s0 + $0x10] sm:$0xff]
    %v33 = vld [vmem:[%s0 + $0x18] sm:$0xff]
    %v34 = vld [vmem:[%s0 + $0x20] sm:$0xff]
    %v35 = vld [vmem:[%s0 + $0x28] sm:$0xff]
    %v36 = vld [vmem:[%s0 + $0x30] sm:$0xff]
    %v37 = vld [vmem:[%s0 + $0x38] sm:$0x7f]
    %v38 = vld [vmem:[%s0 + $0x40] sm:$0xff]
    %v39 = vld [vmem:[%s0 + $0x48] sm:$0xff]
    %v40 = vld [vmem:[%s0 + $0x50] sm:$0xff]
    %v41 = vld [vmem:[%s0 + $0x58] sm:$0xff]
    %v42 = vld [vmem:[%s0 + $0x60] sm:$0xff]
    %v43 = vld [vmem:[%s0 + $0x68] sm:$0xff]
    %v44 = vld [vmem:[%s0 + $0x70] sm:$0xff]
    %v45 = vld [vmem:[%s0 + $0x78] sm:$0x7f]
    %vm46 = vcmask 39936
    %v47 = vsel %vm46, %v30, -inf
    %v48 = vsel %vm46, %v31, -inf
    %v49 = vsel %vm46, %v32, -inf
    %v50 = vmax.f32 %v47, %v49
    %v51 = vsel %vm46, %v33, -inf
    %v52 = vmax.f32 %v48, %v51
    %v53 = vsel %vm46, %v34, -inf
    %v54 = vmax.f32 %v50, %v53
    %v55 = vsel %vm46, %v35, -inf
    %v56 = vmax.f32 %v52, %v55
    %v57 = vsel %vm46, %v36, -inf
    %v58 = vmax.f32 %v54, %v57
    %vm59 = vcmask 38912
    %v60 = vsel %vm59, %v37, -inf
    %v61 = vmax.f32 %v56, %v60
    %v62 = vmax.f32 %v58, %v61
    %v63 = vrot.slane %v62, 4
    %v64 = vmax.f32 %v62, %v63
    %v65 = vrot.slane %v64, 2
    %v66 = vmax.f32 %v64, %v65
    %v67 = vrot.slane %v66, 1
    %v68 = vmax.f32 %v66, %v67
    %v69 = vsel %vm46, %v38, -inf
    %v70 = vsel %vm46, %v39, -inf
    %v71 = vsel %vm46, %v40, -inf
    %v72 = vmax.f32 %v69, %v71
    %v73 = vsel %vm46, %v41, -inf
    %v74 = vmax.f32 %v70, %v73
    %v75 = vsel %vm46, %v42, -inf
    %v76 = vmax.f32 %v72, %v75
    %v77 = vsel %vm46, %v43, -inf
    %v78 = vmax.f32 %v74, %v77
    %v79 = vsel %vm46, %v44, -inf
    %v80 = vmax.f32 %v76, %v79
    %v81 = vsel %vm59, %v45, -inf
    %v82 = vmax.f32 %v78, %v81
    %v83 = vmax.f32 %v80, %v82
    %v84 = vrot.slane %v83, 4
    %v85 = vmax.f32 %v83, %v84
    %v86 = vrot.slane %v85, 2
    %v87 = vmax.f32 %v85, %v86
    %v88 = vrot.slane %v87, 1
    %v89 = vmax.f32 %v87, %v88
    %v90 = vsel %vm46, %v30, 0.0
    %v91 = vsel %vm46, %v31, 0.0
    %v92 = vadd.f32 %v90, %v91
    %v93 = vsel %vm46, %v32, 0.0
    %v94 = vadd.f32 %v92, %v93
    %v95 = vsel %vm46, %v33, 0.0
    %v96 = vadd.f32 %v94, %v95
    %v97 = vsel %vm46, %v34, 0.0
    %v98 = vadd.f32 %v96, %v97
    %v99 = vsel %vm46, %v35, 0.0
    %v100 = vadd.f32 %v98, %v99
    %v101 = vsel %vm46, %v36, 0.0
    %v102 = vadd.f32 %v100, %v101
    %v103 = vsel %vm59, %v37, 0.0
    %v104 = vadd.f32 %v102, %v103
    %v105 = vrot.slane %v104, 4
    %v106 = vadd.f32 %v104, %v105
    %v107 = vrot.slane %v106, 2
    %v108 = vadd.f32 %v106, %v107
    %v109 = vrot.slane %v108, 1
    %v110 = vadd.f32 %v108, %v109
    %v111 = vsel %vm46, %v38, 0.0
    %v112 = vsel %vm46, %v39, 0.0
    %v113 = vadd.f32 %v111, %v112
    %v114 = vsel %vm46, %v40, 0.0
    %v115 = vadd.f32 %v113, %v114
    %v116 = vsel %vm46, %v41, 0.0
    %v117 = vadd.f32 %v115, %v116
    %v118 = vsel %vm46, %v42, 0.0
    %v119 = vadd.f32 %v117, %v118
    %v120 = vsel %vm46, %v43, 0.0
    %v121 = vadd.f32 %v119, %v120
    %v122 = vsel %vm46, %v44, 0.0
    %v123 = vadd.f32 %v121, %v122
    %v124 = vsel %vm59, %v45, 0.0
    %v125 = vadd.f32 %v123, %v124
    %v126 = vrot.slane %v125, 4
    %v127 = vadd.f32 %v125, %v126
    %v128 = vrot.slane %v127, 2
    %v129 = vadd.f32 %v127, %v128
    %v130 = vrot.slane %v129, 1
    %v131 = vadd.f32 %v129, %v130
    %v132 = vmul.f32 %v110, 0.015873017
    %v133 = vmul.f32 %v131, 0.015873017
    %v134 = vld [vmem:[%s2] sm:$0x1f]
    %v135 = vld [vmem:[%s3] sm:$0x1f]
    %vm138 = vcmask 1041409
    %v139 = vsel %vm138, %v133, %v132
    %v140 = vsel %vm46, %v139, 0
    %vm142 = vcmask 1044480
    %v144 = vsel %vm142, %v135, 0
    %146 = vmatpush.msra.mxu0 0.0
    %147 = vmatpush.msra.mxu0 0.0
    %148 = vmatpush.msra.mxu0 0.0
    %149 = vmatpush.msra.mxu0 0.0
    %150 = vmatpush.msra.mxu0 0.0
    %151 = vmatpush.msra.mxu0 0.0
    %152 = vmatpush.msra.mxu0 0.0
    %153 = vmatpush.msra.mxu0 0.0
    %154 = vmatpush.msra.mxu0 0.0
    %155 = vmatpush.msra.mxu0 0.0
    %156 = vmatpush.msra.mxu0 0.0
    %157 = vmatpush.msra.mxu0 0.0
    %158 = vmatpush.msra.mxu0 0.0
    %159 = vmatpush.msra.mxu0 0.0
    %160 = vmatpush.msra.mxu0 0.0
    %161 = vmatpush.msra.mxu0 %v144
    %162 = vmatmul.f32.gmra.mxu0 %v140
    %v163 = vpop.f32.mrf.mxu0
    %v164 = vadd.f32 0.0, %v163
    %165 = vdwg.mxu0
    %v168 = vsel %vm138, %v89, %v68
    %v169 = vsel %vm46, %v168, 0
    %v172 = vsel %vm142, %v134, 0
    %174 = vmatpush.msra.mxu0 0.0
    %175 = vmatpush.msra.mxu0 0.0
    %176 = vmatpush.msra.mxu0 0.0
    %177 = vmatpush.msra.mxu0 0.0
    %178 = vmatpush.msra.mxu0 0.0
    %179 = vmatpush.msra.mxu0 0.0
    %180 = vmatpush.msra.mxu0 0.0
    %181 = vmatpush.msra.mxu0 0.0
    %182 = vmatpush.msra.mxu0 0.0
    %183 = vmatpush.msra.mxu0 0.0
    %184 = vmatpush.msra.mxu0 0.0
    %185 = vmatpush.msra.mxu0 0.0
    %186 = vmatpush.msra.mxu0 0.0
    %187 = vmatpush.msra.mxu0 0.0
    %188 = vmatpush.msra.mxu0 0.0
    %189 = vmatpush.msra.mxu0 %v172
    %190 = vmatmul.f32.gmra.mxu0 %v169
    %v191 = vpop.f32.mrf.mxu0
    %v192 = vadd.f32 %v164, %v191
    %193 = vdwg.mxu0
    %v194 = vld [vmem:[%s1] sm:$0x3]
    %v195 = vld [vmem:[%s4] sm:$0x1f]
    %v197 = vsel %vm46, %v194, 0
    %v200 = vsel %vm142, %v195, 0
    %202 = vmatpush.msra.mxu0 0.0
    %203 = vmatpush.msra.mxu0 0.0
    %204 = vmatpush.msra.mxu0 0.0
    %205 = vmatpush.msra.mxu0 0.0
    %206 = vmatpush.msra.mxu0 0.0
    %207 = vmatpush.msra.mxu0 0.0
    %208 = vmatpush.msra.mxu0 0.0
    %209 = vmatpush.msra.mxu0 0.0
    %210 = vmatpush.msra.mxu0 0.0
    %211 = vmatpush.msra.mxu0 0.0
    %212 = vmatpush.msra.mxu0 0.0
    %213 = vmatpush.msra.mxu0 0.0
    %214 = vmatpush.msra.mxu0 0.0
    %215 = vmatpush.msra.mxu0 0.0
    %216 = vmatpush.msra.mxu0 0.0
    %217 = vmatpush.msra.mxu0 %v200
    %218 = vmatmul.f32.gmra.mxu0 %v197
    %v219 = vpop.f32.mrf.mxu0
    %v220 = vadd.f32 0.0, %v219
    %221 = vdwg.mxu0
    %v222 = vadd.f32 %v192, %v220
    %v223 = vld [vmem:[%s5] sm:$0x1]
    %v225 = vperm.slane %v223, 0
    %v227 = vadd.f32 %v222, %v225
    %v228 = vld [vmem:[%s6] sm:$0xff]
    %v229 = vld [vmem:[%s6 + $0x8] sm:$0x7f]
    %v230 = vld [vmem:[%s7] sm:$0x1]
    %v232 = vperm.slane %v230, 0
    %vm234 = vcmask 121856
    %v236 = vsel %vm234, %v227, 0
    %vm238 = vcmask 1046528
    %v240 = vsel %vm238, %v229, 0
    %242 = vmatpush.msra.mxu0 0.0
    %243 = vmatpush.msra.mxu0 0.0
    %244 = vmatpush.msra.mxu0 0.0
    %245 = vmatpush.msra.mxu0 0.0
    %246 = vmatpush.msra.mxu0 0.0
    %247 = vmatpush.msra.mxu0 0.0
    %248 = vmatpush.msra.mxu0 0.0
    %249 = vmatpush.msra.mxu0 0.0
    %250 = vmatpush.msra.mxu0 0.0
    %251 = vmatpush.msra.mxu0 0.0
    %252 = vmatpush.msra.mxu0 0.0
    %253 = vmatpush.msra.mxu0 0.0
    %254 = vmatpush.msra.mxu0 0.0
    %255 = vmatpush.msra.mxu0 0.0
    %256 = vmatpush.msra.mxu0 %v240
    %257 = vmatpush.msra.mxu0 %v228
    %258 = vmatmul.f32.gmra.mxu0 %v236
    %v259 = vpop.f32.mrf.mxu0
    %v260 = vadd.f32 %v232, %v259
    %261 = vdwg.mxu0
    %vm262 = vcmask 66560
    %263 = vst.msk [vmem:[#allocation2] sm:$0x3] %vm262, %v260
    // Predicated region
    $region34: #{tpu_custom_call.1} parent=1 // pred_check
      _
    $region35: #{tpu_custom_call.1} parent=1 // pred_check_branch
      %265 = sbr.rel (0) target = $region37
    $region36: #{tpu_custom_call.1} parent=1 // pred_region
      %267 = vsyncadd [#allocation3], 0
      %s269 = sshll.u32 [#allocation2], 4
      %s270 = int_to_ptr.vmem [resolvable:$true] %s269
      %s271 = sshll.u32 %s8, 4
      %s272 = int_to_ptr.hbm [resolvable:$true] %s271
      %274 = dma.vmem_to_hbm [thread:$0]  %s270, 32, %s272, [#allocation3]
    $region37: #{tpu_custom_call.1} parent=1 // pred_fallthru
      _
    // Predicated region
    $region38: #{tpu_custom_call.1} parent=1 // pred_check
      _
    $region39: #{tpu_custom_call.1} parent=1 // pred_check_branch
      %276 = sbr.rel (0) target = $region41
    $region40: #{tpu_custom_call.1} parent=1 // pred_region
      %278 = dma.done [#allocation3], 32
    $region41: #{tpu_custom_call.1} parent=1 // pred_fallthru
      _
    %279 = vsyncpa [#allocation3], 1

</llo_original>
